<compile_context>
chip_gen: v6e
topology: v6e:2x2x1
jax: 0.10.0
libtpu: 0.0.40
codegen_flags: <defaults>
</compile_context>

<pallas_src>
import jax
import jax.numpy as jnp
from jax.experimental import pallas as pl
from jax.experimental.pallas import tpu as pltpu


def _mf_fused_kernel(uf_ref, if_ref, uid_ref, iid_ref, o_ref):
    # uf_ref: (F, N_users) f32  -- full user-factor table, resident in VMEM
    # if_ref: (F, N_items) f32  -- full item-factor table, resident in VMEM
    # uid_ref, iid_ref: (1, TB) int32 -- 0-indexed ids for this batch tile
    # o_ref: (1, TB) f32  -- lane-dense output tile (batch on lanes)
    tb = uid_ref.shape[1]
    n_users = uf_ref.shape[1]
    n_items = if_ref.shape[1]

    uid = uid_ref[...]  # (1, TB) int32
    iid = iid_ref[...]  # (1, TB) int32

    # In-kernel gather as one-hot x table matmul on the MXU:
    #   u_t[:, b] = user_factors[uid[b], :]   (batch stays on the lane axis)
    onehot_u = (jax.lax.broadcasted_iota(jnp.int32, (n_users, tb), 0) == uid
                ).astype(jnp.float32)                                   # (N_u, TB)
    onehot_i = (jax.lax.broadcasted_iota(jnp.int32, (n_items, tb), 0) == iid
                ).astype(jnp.float32)                                   # (N_i, TB)

    u_t = jnp.dot(uf_ref[...], onehot_u,
                  preferred_element_type=jnp.float32)                   # (F, TB)
    it_t = jnp.dot(if_ref[...], onehot_i,
                   preferred_element_type=jnp.float32)                  # (F, TB)

    prod = u_t * it_t                                  # VPU elementwise, full lanes
    s = jnp.sum(prod, axis=0, keepdims=True)           # (1, TB) sublane reduce (XLU)
    o_ref[...] = (s * 5.0).astype(o_ref.dtype)


def matrix_factorization_forward(user, item, user_factors, item_factors, *, tb=8192):
    """user, item: int (B,), 1-indexed ids.  Returns float32 (B,)."""
    B = user.shape[0]
    n_users, F = user_factors.shape
    n_items, _ = item_factors.shape

    # 1-indexed -> 0-indexed (cheap: B ints, done once in the wrapper).
    uid = user.astype(jnp.int32) - 1
    iid = item.astype(jnp.int32) - 1

    # Clamp the batch tile so small batches stay lane-dense, then pad the *id
    # vectors* (not gathered activations) up to the tile multiple.
    tb = max(128, min(tb, pl.cdiv(B, 128) * 128))
    n_tiles = pl.cdiv(B, tb)
    b_pad = n_tiles * tb
    if b_pad != B:
        uid = jnp.pad(uid, (0, b_pad - B))   # padded lanes gather row 0; sliced off below
        iid = jnp.pad(iid, (0, b_pad - B))
    uid2 = uid.reshape(1, b_pad)
    iid2 = iid.reshape(1, b_pad)

    # Tables passed transposed (F, N) so gathered tiles land batch-on-lanes.
    # Tables are tiny here and stay resident in VMEM across all grid steps.
    # TODO(synk): for factor tables too large for VMEM, fall back to a
    # wrapper-side gather (or manual DMA-gather kernel) instead of the
    # in-kernel one-hot matmul.
    uf_t = user_factors.T.astype(jnp.float32)   # (F, N_users)
    if_t = item_factors.T.astype(jnp.float32)   # (F, N_items)

    out = pl.pallas_call(
        _mf_fused_kernel,
        out_shape=jax.ShapeDtypeStruct((n_tiles, tb), jnp.float32),
        grid_spec=pltpu.PrefetchScalarGridSpec(
            num_scalar_prefetch=0,
            grid=(n_tiles,),
            in_specs=[
                # Full tables, same block every step -> fetched once, kept in VMEM.
                pl.BlockSpec((F, n_users), lambda i: (0, 0)),
                pl.BlockSpec((F, n_items), lambda i: (0, 0)),
                # Per-tile id vectors (lane axis = batch).
                pl.BlockSpec((1, tb), lambda i: (0, i)),
                pl.BlockSpec((1, tb), lambda i: (0, i)),
            ],
            out_specs=pl.BlockSpec((1, tb), lambda i: (i, 0)),  # lane-dense output
        ),
        compiler_params=pltpu.CompilerParams(
            dimension_semantics=("parallel",),  # batch tiles independent -> megacore-shardable
        ),
    )(uf_t, if_t, uid2, iid2)

    return out.reshape(b_pad)[:B]


if __name__ == "__main__":
    n_users, n_items, n_factors = 10, 15, 20
    B = 300  # non-multiple of 128 -> exercises id padding + tile clamp

    key = jax.random.PRNGKey(0)
    k_u, k_it, k_uid, k_iid = jax.random.split(key, 4)

    # Deterministic "embedding" parameters (analogous to nn.Embedding weights).
    user_factors = jax.random.normal(k_u, (n_users, n_factors), dtype=jnp.float32)
    item_factors = jax.random.normal(k_it, (n_items, n_factors), dtype=jnp.float32)

    # 1-indexed ids, as the PyTorch forward expects.
    user = jax.random.randint(k_uid, (B,), 1, n_users + 1, dtype=jnp.int32)
    item = jax.random.randint(k_iid, (B,), 1, n_items + 1, dtype=jnp.int32)

    out = matrix_factorization_forward(user, item, user_factors, item_factors)
    out = jax.block_until_ready(out)

    # Pure-JAX reference check.
    u = user_factors[user - 1]
    it = item_factors[item - 1]
    ref = (u * it).sum(axis=1) * 5.0
    assert out.shape == user.shape
    assert jnp.allclose(out, ref, rtol=1e-5, atol=1e-5)

    print("KERNEL_OK")
</pallas_src>

<mosaic_0001>
module attributes {stable_mosaic.version = 11 : i64} {
  func.func @_mf_fused_kernel(%arg0: i32, %arg1: memref<20x10xf32, #tpu.memory_space<vmem>>, %arg2: memref<20x15xf32, #tpu.memory_space<vmem>>, %arg3: memref<1x384xi32, #tpu.memory_space<vmem>>, %arg4: memref<1x384xi32, #tpu.memory_space<vmem>>, %arg5: memref<1x384xf32, #tpu.memory_space<vmem>>) attributes {dimension_semantics = [#tpu.dimension_semantics<parallel>], iteration_bounds = array<i64: 1>, scalar_prefetch = 0 : i64, scratch_operands = 0 : i64, tpu.core_type = #tpu.core_type<tc>, window_params = [{pipeline_mode = #tpu.pipeline_mode<synchronous>, transform_indices = @transform_0, window_bounds = array<i64: 20, 10>}, {pipeline_mode = #tpu.pipeline_mode<synchronous>, transform_indices = @transform_1, window_bounds = array<i64: 20, 15>}, {transform_indices = @transform_2, window_bounds = array<i64: 1, 384>}, {transform_indices = @transform_3, window_bounds = array<i64: 1, 384>}, {transform_indices = @transform_4, window_bounds = array<i64: 1, 384>}]} {
    %c0 = arith.constant 0 : index
    %c0_0 = arith.constant 0 : index
    %0 = vector.load %arg3[%c0, %c0_0] : memref<1x384xi32, #tpu.memory_space<vmem>>, vector<1x384xi32>
    %c0_1 = arith.constant 0 : index
    %c0_2 = arith.constant 0 : index
    %1 = vector.load %arg4[%c0_1, %c0_2] : memref<1x384xi32, #tpu.memory_space<vmem>>, vector<1x384xi32>
    %2 = tpu.iota {dimensions = array<i32: 0>} : vector<10x384xi32>
    %3 = vector.broadcast %0 : vector<1x384xi32> to vector<10x384xi32>
    %4 = arith.cmpi eq, %2, %3 : vector<10x384xi32>
    %5 = arith.extui %4 : vector<10x384xi1> to vector<10x384xi32>
    %6 = arith.sitofp %5 : vector<10x384xi32> to vector<10x384xf32>
    %7 = tpu.iota {dimensions = array<i32: 0>} : vector<15x384xi32>
    %8 = vector.broadcast %1 : vector<1x384xi32> to vector<15x384xi32>
    %9 = arith.cmpi eq, %7, %8 : vector<15x384xi32>
    %10 = arith.extui %9 : vector<15x384xi1> to vector<15x384xi32>
    %11 = arith.sitofp %10 : vector<15x384xi32> to vector<15x384xf32>
    %c0_3 = arith.constant 0 : index
    %c0_4 = arith.constant 0 : index
    %12 = vector.load %arg1[%c0_3, %c0_4] : memref<20x10xf32, #tpu.memory_space<vmem>>, vector<20x10xf32>
    %cst = arith.constant dense<0.000000e+00> : vector<20x384xf32>
    %13 = tpu.matmul %12, %6, %cst {dimension_numbers = #tpu.dot_dimension_numbers<[1], [0], [0], [1], [0, 0, 1, 1], [], []>} : vector<20x10xf32>, vector<10x384xf32>, vector<20x384xf32> -> vector<20x384xf32>
    %c0_5 = arith.constant 0 : index
    %c0_6 = arith.constant 0 : index
    %14 = vector.load %arg2[%c0_5, %c0_6] : memref<20x15xf32, #tpu.memory_space<vmem>>, vector<20x15xf32>
    %cst_7 = arith.constant dense<0.000000e+00> : vector<20x384xf32>
    %15 = tpu.matmul %14, %11, %cst_7 {dimension_numbers = #tpu.dot_dimension_numbers<[1], [0], [0], [1], [0, 0, 1, 1], [], []>} : vector<20x15xf32>, vector<15x384xf32>, vector<20x384xf32> -> vector<20x384xf32>
    %16 = arith.mulf %13, %15 : vector<20x384xf32>
    %cst_8 = arith.constant dense<0.000000e+00> : vector<384xf32>
    %17 = vector.multi_reduction <add>, %16, %cst_8 [0] : vector<20x384xf32> to vector<384xf32>
    %18 = vector.shape_cast %17 : vector<384xf32> to vector<1x384xf32>
    %cst_9 = arith.constant 5.000000e+00 : f32
    %19 = vector.broadcast %cst_9 : f32 to vector<1x384xf32>
    %20 = arith.mulf %18, %19 : vector<1x384xf32>
    %c0_10 = arith.constant 0 : index
    %c0_11 = arith.constant 0 : index
    %21 = vector.load %arg5[%c0_10, %c0_11] : memref<1x384xf32, #tpu.memory_space<vmem>>, vector<1x384xf32>
    tpu.vector_store %arg5[%c0_10, %c0_11], %20 {strides = array<i32>} : memref<1x384xf32, #tpu.memory_space<vmem>>, vector<1x384xf32>,
    return
  }
  func.func @transform_0(%arg0: i32) -> (i32, i32) {
    %c0_i32 = arith.constant 0 : i32
    %c0_i32_0 = arith.constant 0 : i32
    %c0_i32_1 = arith.constant 0 : i32
    return %c0_i32, %c0_i32_0 : i32, i32
  }
  func.func @transform_1(%arg0: i32) -> (i32, i32) {
    %c0_i32 = arith.constant 0 : i32
    %c0_i32_0 = arith.constant 0 : i32
    %c0_i32_1 = arith.constant 0 : i32
    return %c0_i32, %c0_i32_0 : i32, i32
  }
  func.func @transform_2(%arg0: i32) -> (i32, i32) {
    %c0_i32 = arith.constant 0 : i32
    %c0_i32_0 = arith.constant 0 : i32
    return %c0_i32, %arg0 : i32, i32
  }
  func.func @transform_3(%arg0: i32) -> (i32, i32) {
    %c0_i32 = arith.constant 0 : i32
    %c0_i32_0 = arith.constant 0 : i32
    return %c0_i32, %arg0 : i32, i32
  }
  func.func @transform_4(%arg0: i32) -> (i32, i32) {
    %c0_i32 = arith.constant 0 : i32
    %c0_i32_0 = arith.constant 0 : i32
    return %arg0, %c0_i32 : i32, i32
  }
}

</mosaic_0001>

<llo_original>
// kernel: tpu_custom_call.1
$region0: #{tpu_custom_call.1}
  #allocation0 [shape = 'u32[]', space=smem, size = 0x4, offset = 0x4, fixed_abs, tag = 'smem constant byte address 0x4 - core index']
  #allocation1 [shape = 'u32[144,128]{1,0:T(1,128)}', space=vmem, size = 0x12000, scoped, tag = 'internal scratch']
  %s0 = inlined_call_operand.vmem [shape: f32[20,10], index: 0, kind: input, shape index: {}]
  %s1 = inlined_call_operand.vmem [shape: f32[20,15], index: 1, kind: input, shape index: {}]
  %s2 = inlined_call_operand.vmem [shape: s32[1,384], index: 2, kind: input, shape index: {}]
  %s3 = inlined_call_operand.vmem [shape: s32[1,384], index: 3, kind: input, shape index: {}]
  %s4 = inlined_call_operand.hbm [shape: f32[1,384], index: 4, kind: output, shape index: {}]
  %s5 = sld [smem:[#allocation0]]
  $region26: #{tpu_custom_call.1} parent=0
    _
  %s7 = ssub.s32 1, %s5
  %s8 = scalar_select 0, %s7, %s5
  $region1: #{tpu_custom_call.1} parent=0
    #allocation2 [shape = 'u8[1536]{0}', space=vmem, size = 0x800, scoped, tag = 'output window, operand 0, single buffered']
    #allocation3 [shape = 's32[1]{0}', space=sflag, size = 0x4, scoped, tag = 'scoped memory for tpu_custom_call.1']
    %9 = vsyncpa [#allocation3], 0
    // Predicated region
    $region2: #{tpu_custom_call.1} parent=1 // pred_check
      _
    $region3: #{tpu_custom_call.1} parent=1 // pred_check_branch
      %11 = sbr.rel (0) target = $region5
    $region4: #{tpu_custom_call.1} parent=1 // pred_region
      _
    $region5: #{tpu_custom_call.1} parent=1 // pred_fallthru
      _
    // Predicated region
    $region6: #{tpu_custom_call.1} parent=1 // pred_check
      _
    $region7: #{tpu_custom_call.1} parent=1 // pred_check_branch
      %13 = sbr.rel (0) target = $region9
    $region8: #{tpu_custom_call.1} parent=1 // pred_region
      _
    $region9: #{tpu_custom_call.1} parent=1 // pred_fallthru
      _
    // Predicated region
    $region10: #{tpu_custom_call.1} parent=1 // pred_check
      _
    $region11: #{tpu_custom_call.1} parent=1 // pred_check_branch
      %15 = sbr.rel (0) target = $region13
    $region12: #{tpu_custom_call.1} parent=1 // pred_region
      _
    $region13: #{tpu_custom_call.1} parent=1 // pred_fallthru
      _
    // Predicated region
    $region14: #{tpu_custom_call.1} parent=1 // pred_check
      _
    $region15: #{tpu_custom_call.1} parent=1 // pred_check_branch
      %17 = sbr.rel (0) target = $region17
    $region16: #{tpu_custom_call.1} parent=1 // pred_region
      _
    $region17: #{tpu_custom_call.1} parent=1 // pred_fallthru
      _
    %v18 = vld [vmem:[%s2] sm:$0x7]
    %v19 = vld [vmem:[%s3] sm:$0x7]
    %v20 = vlaneseq
    %v21 = vshrl.u32 %v20, 7
    %v22 = vadd.s32 %v21, 8
    %v23 = vlaneseq
    %v24 = vshrl.u32 %v23, 7
    %v25 = vsub.s32 0, %v24
    %v26 = vrot.slane %v18, %v25
    %v27 = vlaneseq
    %v28 = vshrl.u32 %v27, 7
    %v29 = vsub.s32 1, %v28
    %v30 = vrot.slane %v18, %v29
    %v31 = vlaneseq
    %v32 = vshrl.u32 %v31, 7
    %v33 = vsub.s32 2, %v32
    %v34 = vrot.slane %v18, %v33
    %vm35 = vcmp.eq.s32.totalorder %v21, %v26
    %vm36 = vcmp.eq.s32.totalorder %v21, %v30
    %vm37 = vcmp.eq.s32.totalorder %v21, %v34
    %vm38 = vcmp.eq.s32.totalorder %v22, %v26
    %vm39 = vcmp.eq.s32.totalorder %v22, %v30
    %vm40 = vcmp.eq.s32.totalorder %v22, %v34
    %v41 = vsel %vm35, 1, 0
    %v42 = vsel %vm36, 1, 0
    %v43 = vsel %vm37, 1, 0
    %v44 = vsel %vm38, 1, 0
    %v45 = vsel %vm39, 1, 0
    %v46 = vsel %vm40, 1, 0
    %v47 = vcvt.s32.f32 %v41
    %v48 = vcvt.s32.f32 %v42
    %v49 = vcvt.s32.f32 %v43
    %v50 = vcvt.s32.f32 %v44
    %v51 = vcvt.s32.f32 %v45
    %v52 = vcvt.s32.f32 %v46
    %v53 = vlaneseq
    %v54 = vshrl.u32 %v53, 7
    %v55 = vsub.s32 0, %v54
    %v56 = vrot.slane %v19, %v55
    %v57 = vlaneseq
    %v58 = vshrl.u32 %v57, 7
    %v59 = vsub.s32 1, %v58
    %v60 = vrot.slane %v19, %v59
    %v61 = vlaneseq
    %v62 = vshrl.u32 %v61, 7
    %v63 = vsub.s32 2, %v62
    %v64 = vrot.slane %v19, %v63
    %vm65 = vcmp.eq.s32.totalorder %v21, %v56
    %vm66 = vcmp.eq.s32.totalorder %v21, %v60
    %vm67 = vcmp.eq.s32.totalorder %v21, %v64
    %vm68 = vcmp.eq.s32.totalorder %v22, %v56
    %vm69 = vcmp.eq.s32.totalorder %v22, %v60
    %vm70 = vcmp.eq.s32.totalorder %v22, %v64
    %v71 = vsel %vm65, 1, 0
    %v72 = vsel %vm66, 1, 0
    %v73 = vsel %vm67, 1, 0
    %v74 = vsel %vm68, 1, 0
    %v75 = vsel %vm69, 1, 0
    %v76 = vsel %vm70, 1, 0
    %v77 = vcvt.s32.f32 %v71
    %v78 = vcvt.s32.f32 %v72
    %v79 = vcvt.s32.f32 %v73
    %v80 = vcvt.s32.f32 %v74
    %v81 = vcvt.s32.f32 %v75
    %v82 = vcvt.s32.f32 %v76
    %v83 = vld [vmem:[%s0] sm:$0xff]
    %v84 = vld [vmem:[%s0 + $0x8] sm:$0xff]
    %v85 = vld [vmem:[%s0 + $0x10] sm:$0xf]
    %vm86 = vcmask 80896
    %v88 = vsel %vm86, %v83, 0
    %v91 = vsel %vm86, %v84, 0
    %v94 = vsel %vm86, %v85, 0
    %vm96 = vcmask 1041408
    %v98 = vsel %vm96, %v50, 0
    %v101 = vsel %vm96, %v51, 0
    %v104 = vsel %vm96, %v52, 0
    %106 = vmatprep.subr.mxu0 0.0
    %107 = vmatpush1.msra.mxu0 0.0
    %108 = vmatprep.subr.mxu0 0.0
    %109 = vmatpush1.msra.mxu0 0.0
    %110 = vmatprep.subr.mxu0 0.0
    %111 = vmatpush1.msra.mxu0 0.0
    %112 = vmatprep.subr.mxu0 0.0
    %113 = vmatpush1.msra.mxu0 0.0
    %114 = vmatprep.subr.mxu0 0.0
    %115 = vmatpush1.msra.mxu0 0.0
    %116 = vmatprep.subr.mxu0 0.0
    %117 = vmatpush1.msra.mxu0 0.0
    %118 = vmatprep.subr.mxu0 0.0
    %119 = vmatpush1.msra.mxu0 0.0
    %120 = vmatprep.subr.mxu0 0.0
    %121 = vmatpush1.msra.mxu0 0.0
    %122 = vmatprep.subr.mxu0 0.0
    %123 = vmatpush1.msra.mxu0 0.0
    %124 = vmatprep.subr.mxu0 0.0
    %125 = vmatpush1.msra.mxu0 0.0
    %126 = vmatprep.subr.mxu0 0.0
    %127 = vmatpush1.msra.mxu0 0.0
    %128 = vmatprep.subr.mxu0 0.0
    %129 = vmatpush1.msra.mxu0 0.0
    %130 = vmatprep.subr.mxu0 0.0
    %131 = vmatpush1.msra.mxu0 0.0
    %132 = vmatprep.subr.mxu0 0.0
    %133 = vmatpush1.msra.mxu0 0.0
    %134 = vmatprep.subr.mxu0 %v101
    %135 = vmatpush1.msra.mxu0 %v98
    %136 = vmatprep.subr.mxu0 %v48
    %137 = vmatpush1.msra.mxu0 %v47
    %138 = vmatprep.subr.mxu0 0.0
    %139 = vmatpush2.msra.mxu0 0.0
    %140 = vmatprep.subr.mxu0 0.0
    %141 = vmatpush2.msra.mxu0 0.0
    %142 = vmatprep.subr.mxu0 0.0
    %143 = vmatpush2.msra.mxu0 0.0
    %144 = vmatprep.subr.mxu0 0.0
    %145 = vmatpush2.msra.mxu0 0.0
    %146 = vmatprep.subr.mxu0 0.0
    %147 = vmatpush2.msra.mxu0 0.0
    %148 = vmatprep.subr.mxu0 0.0
    %149 = vmatpush2.msra.mxu0 0.0
    %150 = vmatprep.subr.mxu0 0.0
    %151 = vmatpush2.msra.mxu0 0.0
    %152 = vmatprep.subr.mxu0 0.0
    %153 = vmatpush2.msra.mxu0 0.0
    %154 = vmatprep.subr.mxu0 0.0
    %155 = vmatpush2.msra.mxu0 0.0
    %156 = vmatprep.subr.mxu0 0.0
    %157 = vmatpush2.msra.mxu0 0.0
    %158 = vmatprep.subr.mxu0 0.0
    %159 = vmatpush2.msra.mxu0 0.0
    %160 = vmatprep.subr.mxu0 0.0
    %161 = vmatpush2.msra.mxu0 0.0
    %162 = vmatprep.subr.mxu0 0.0
    %163 = vmatpush2.msra.mxu0 0.0
    %164 = vmatprep.subr.mxu0 0.0
    %165 = vmatpush2.msra.mxu0 0.0
    %166 = vmatprep.subr.mxu0 0.0
    %167 = vmatpush2.msra.mxu0 0.0
    %168 = vmatprep.subr.mxu0 0.0
    %169 = vmatpush2.msra.mxu0 0.0
    %170 = vmatprep.mubr.f32.mxu0 0.0
    %171 = vmatmul.mubr.f32.gmra.mxu0 %v88
    %v172 = vpop.f32.mrf.mxu0
    %v173 = vadd.f32 0.0, %v172
    %v174 = vpop.f32.mrf.mxu0
    %v175 = vadd.f32 0.0, %v174
    %176 = vmatprep.mubr.f32.mxu0 0.0
    %177 = vmatmul.mubr.f32.gmra.mxu0 %v91
    %v178 = vpop.f32.mrf.mxu0
    %v179 = vadd.f32 0.0, %v178
    %v180 = vpop.f32.mrf.mxu0
    %v181 = vadd.f32 0.0, %v180
    %182 = vmatprep.mubr.f32.mxu0 0.0
    %183 = vmatmul.mubr.f32.gmra.mxu0 %v94
    %v184 = vpop.f32.mrf.mxu0
    %v185 = vadd.f32 0.0, %v184
    %v186 = vpop.f32.mrf.mxu0
    %v187 = vadd.f32 0.0, %v186
    %188 = vdwg.mxu0
    %189 = vmatprep.subr.mxu0 0.0
    %190 = vmatpush1.msra.mxu0 0.0
    %191 = vmatprep.subr.mxu0 0.0
    %192 = vmatpush1.msra.mxu0 0.0
    %193 = vmatprep.subr.mxu0 0.0
    %194 = vmatpush1.msra.mxu0 0.0
    %195 = vmatprep.subr.mxu0 0.0
    %196 = vmatpush1.msra.mxu0 0.0
    %197 = vmatprep.subr.mxu0 0.0
    %198 = vmatpush1.msra.mxu0 0.0
    %199 = vmatprep.subr.mxu0 0.0
    %200 = vmatpush1.msra.mxu0 0.0
    %201 = vmatprep.subr.mxu0 0.0
    %202 = vmatpush1.msra.mxu0 0.0
    %203 = vmatprep.subr.mxu0 0.0
    %204 = vmatpush1.msra.mxu0 0.0
    %205 = vmatprep.subr.mxu0 0.0
    %206 = vmatpush1.msra.mxu0 0.0
    %207 = vmatprep.subr.mxu0 0.0
    %208 = vmatpush1.msra.mxu0 0.0
    %209 = vmatprep.subr.mxu0 0.0
    %210 = vmatpush1.msra.mxu0 0.0
    %211 = vmatprep.subr.mxu0 0.0
    %212 = vmatpush1.msra.mxu0 0.0
    %213 = vmatprep.subr.mxu0 0.0
    %214 = vmatpush1.msra.mxu0 0.0
    %215 = vmatprep.subr.mxu0 0.0
    %216 = vmatpush1.msra.mxu0 0.0
    %217 = vmatprep.subr.mxu0 0.0
    %218 = vmatpush1.msra.mxu0 %v104
    %219 = vmatprep.subr.mxu0 0.0
    %220 = vmatpush1.msra.mxu0 %v49
    %221 = vmatprep.subr.mxu0 0.0
    %222 = vmatpush2.msra.mxu0 0.0
    %223 = vmatprep.subr.mxu0 0.0
    %224 = vmatpush2.msra.mxu0 0.0
    %225 = vmatprep.subr.mxu0 0.0
    %226 = vmatpush2.msra.mxu0 0.0
    %227 = vmatprep.subr.mxu0 0.0
    %228 = vmatpush2.msra.mxu0 0.0
    %229 = vmatprep.subr.mxu0 0.0
    %230 = vmatpush2.msra.mxu0 0.0
    %231 = vmatprep.subr.mxu0 0.0
    %232 = vmatpush2.msra.mxu0 0.0
    %233 = vmatprep.subr.mxu0 0.0
    %234 = vmatpush2.msra.mxu0 0.0
    %235 = vmatprep.subr.mxu0 0.0
    %236 = vmatpush2.msra.mxu0 0.0
    %237 = vmatprep.subr.mxu0 0.0
    %238 = vmatpush2.msra.mxu0 0.0
    %239 = vmatprep.subr.mxu0 0.0
    %240 = vmatpush2.msra.mxu0 0.0
    %241 = vmatprep.subr.mxu0 0.0
    %242 = vmatpush2.msra.mxu0 0.0
    %243 = vmatprep.subr.mxu0 0.0
    %244 = vmatpush2.msra.mxu0 0.0
    %245 = vmatprep.subr.mxu0 0.0
    %246 = vmatpush2.msra.mxu0 0.0
    %247 = vmatprep.subr.mxu0 0.0
    %248 = vmatpush2.msra.mxu0 0.0
    %249 = vmatprep.subr.mxu0 0.0
    %250 = vmatpush2.msra.mxu0 0.0
    %251 = vmatprep.subr.mxu0 0.0
    %252 = vmatpush2.msra.mxu0 0.0
    %253 = vmatprep.mubr.f32.mxu0 0.0
    %254 = vmatmul.mubr.f32.gmra.mxu0 %v88
    %v255 = vpop.f32.mrf.mxu0
    %v256 = vadd.f32 0.0, %v255
    %v257 = vpop.f32.mrf.mxu0
    %258 = vmatprep.mubr.f32.mxu0 0.0
    %259 = vmatmul.mubr.f32.gmra.mxu0 %v91
    %v260 = vpop.f32.mrf.mxu0
    %v261 = vadd.f32 0.0, %v260
    %v262 = vpop.f32.mrf.mxu0
    %263 = vmatprep.mubr.f32.mxu0 0.0
    %264 = vmatmul.mubr.f32.gmra.mxu0 %v94
    %v265 = vpop.f32.mrf.mxu0
    %v266 = vadd.f32 0.0, %v265
    %v267 = vpop.f32.mrf.mxu0
    %268 = vdwg.mxu0
    %v269 = vld [vmem:[%s1] sm:$0xff]
    %v270 = vld [vmem:[%s1 + $0x8] sm:$0xff]
    %v271 = vld [vmem:[%s1 + $0x10] sm:$0xf]
    %vm272 = vcmask 121856
    %v274 = vsel %vm272, %v269, 0
    %v277 = vsel %vm272, %v270, 0
    %v280 = vsel %vm272, %v271, 0
    %vm282 = vcmask 1046528
    %v284 = vsel %vm282, %v80, 0
    %v287 = vsel %vm282, %v81, 0
    %v290 = vsel %vm282, %v82, 0
    %292 = vmatprep.subr.mxu0 0.0
    %293 = vmatpush1.msra.mxu0 0.0
    %294 = vmatprep.subr.mxu0 0.0
    %295 = vmatpush1.msra.mxu0 0.0
    %296 = vmatprep.subr.mxu0 0.0
    %297 = vmatpush1.msra.mxu0 0.0
    %298 = vmatprep.subr.mxu0 0.0
    %299 = vmatpush1.msra.mxu0 0.0
    %300 = vmatprep.subr.mxu0 0.0
    %301 = vmatpush1.msra.mxu0 0.0
    %302 = vmatprep.subr.mxu0 0.0
    %303 = vmatpush1.msra.mxu0 0.0
    %304 = vmatprep.subr.mxu0 0.0
    %305 = vmatpush1.msra.mxu0 0.0
    %306 = vmatprep.subr.mxu0 0.0
    %307 = vmatpush1.msra.mxu0 0.0
    %308 = vmatprep.subr.mxu0 0.0
    %309 = vmatpush1.msra.mxu0 0.0
    %310 = vmatprep.subr.mxu0 0.0
    %311 = vmatpush1.msra.mxu0 0.0
    %312 = vmatprep.subr.mxu0 0.0
    %313 = vmatpush1.msra.mxu0 0.0
    %314 = vmatprep.subr.mxu0 0.0
    %315 = vmatpush1.msra.mxu0 0.0
    %316 = vmatprep.subr.mxu0 0.0
    %317 = vmatpush1.msra.mxu0 0.0
    %318 = vmatprep.subr.mxu0 0.0
    %319 = vmatpush1.msra.mxu0 0.0
    %320 = vmatprep.subr.mxu0 %v287
    %321 = vmatpush1.msra.mxu0 %v284
    %322 = vmatprep.subr.mxu0 %v78
    %323 = vmatpush1.msra.mxu0 %v77
    %324 = vmatprep.subr.mxu0 0.0
    %325 = vmatpush2.msra.mxu0 0.0
    %326 = vmatprep.subr.mxu0 0.0
    %327 = vmatpush2.msra.mxu0 0.0
    %328 = vmatprep.subr.mxu0 0.0
    %329 = vmatpush2.msra.mxu0 0.0
    %330 = vmatprep.subr.mxu0 0.0
    %331 = vmatpush2.msra.mxu0 0.0
    %332 = vmatprep.subr.mxu0 0.0
    %333 = vmatpush2.msra.mxu0 0.0
    %334 = vmatprep.subr.mxu0 0.0
    %335 = vmatpush2.msra.mxu0 0.0
    %336 = vmatprep.subr.mxu0 0.0
    %337 = vmatpush2.msra.mxu0 0.0
    %338 = vmatprep.subr.mxu0 0.0
    %339 = vmatpush2.msra.mxu0 0.0
    %340 = vmatprep.subr.mxu0 0.0
    %341 = vmatpush2.msra.mxu0 0.0
    %342 = vmatprep.subr.mxu0 0.0
    %343 = vmatpush2.msra.mxu0 0.0
    %344 = vmatprep.subr.mxu0 0.0
    %345 = vmatpush2.msra.mxu0 0.0
    %346 = vmatprep.subr.mxu0 0.0
    %347 = vmatpush2.msra.mxu0 0.0
    %348 = vmatprep.subr.mxu0 0.0
    %349 = vmatpush2.msra.mxu0 0.0
    %350 = vmatprep.subr.mxu0 0.0
    %351 = vmatpush2.msra.mxu0 0.0
    %352 = vmatprep.subr.mxu0 0.0
    %353 = vmatpush2.msra.mxu0 0.0
    %354 = vmatprep.subr.mxu0 0.0
    %355 = vmatpush2.msra.mxu0 0.0
    %356 = vmatprep.mubr.f32.mxu0 0.0
    %357 = vmatmul.mubr.f32.gmra.mxu0 %v274
    %v358 = vpop.f32.mrf.mxu0
    %v359 = vadd.f32 0.0, %v358
    %v360 = vpop.f32.mrf.mxu0
    %v361 = vadd.f32 0.0, %v360
    %362 = vmatprep.mubr.f32.mxu0 0.0
    %363 = vmatmul.mubr.f32.gmra.mxu0 %v277
    %v364 = vpop.f32.mrf.mxu0
    %v365 = vadd.f32 0.0, %v364
    %v366 = vpop.f32.mrf.mxu0
    %v367 = vadd.f32 0.0, %v366
    %368 = vmatprep.mubr.f32.mxu0 0.0
    %369 = vmatmul.mubr.f32.gmra.mxu0 %v280
    %v370 = vpop.f32.mrf.mxu0
    %v371 = vadd.f32 0.0, %v370
    %v372 = vpop.f32.mrf.mxu0
    %v373 = vadd.f32 0.0, %v372
    %374 = vdwg.mxu0
    %375 = vmatprep.subr.mxu0 0.0
    %376 = vmatpush1.msra.mxu0 0.0
    %377 = vmatprep.subr.mxu0 0.0
    %378 = vmatpush1.msra.mxu0 0.0
    %379 = vmatprep.subr.mxu0 0.0
    %380 = vmatpush1.msra.mxu0 0.0
    %381 = vmatprep.subr.mxu0 0.0
    %382 = vmatpush1.msra.mxu0 0.0
    %383 = vmatprep.subr.mxu0 0.0
    %384 = vmatpush1.msra.mxu0 0.0
    %385 = vmatprep.subr.mxu0 0.0
    %386 = vmatpush1.msra.mxu0 0.0
    %387 = vmatprep.subr.mxu0 0.0
    %388 = vmatpush1.msra.mxu0 0.0
    %389 = vmatprep.subr.mxu0 0.0
    %390 = vmatpush1.msra.mxu0 0.0
    %391 = vmatprep.subr.mxu0 0.0
    %392 = vmatpush1.msra.mxu0 0.0
    %393 = vmatprep.subr.mxu0 0.0
    %394 = vmatpush1.msra.mxu0 0.0
    %395 = vmatprep.subr.mxu0 0.0
    %396 = vmatpush1.msra.mxu0 0.0
    %397 = vmatprep.subr.mxu0 0.0
    %398 = vmatpush1.msra.mxu0 0.0
    %399 = vmatprep.subr.mxu0 0.0
    %400 = vmatpush1.msra.mxu0 0.0
    %401 = vmatprep.subr.mxu0 0.0
    %402 = vmatpush1.msra.mxu0 0.0
    %403 = vmatprep.subr.mxu0 0.0
    %404 = vmatpush1.msra.mxu0 %v290
    %405 = vmatprep.subr.mxu0 0.0
    %406 = vmatpush1.msra.mxu0 %v79
    %407 = vmatprep.subr.mxu0 0.0
    %408 = vmatpush2.msra.mxu0 0.0
    %409 = vmatprep.subr.mxu0 0.0
    %410 = vmatpush2.msra.mxu0 0.0
    %411 = vmatprep.subr.mxu0 0.0
    %412 = vmatpush2.msra.mxu0 0.0
    %413 = vmatprep.subr.mxu0 0.0
    %414 = vmatpush2.msra.mxu0 0.0
    %415 = vmatprep.subr.mxu0 0.0
    %416 = vmatpush2.msra.mxu0 0.0
    %417 = vmatprep.subr.mxu0 0.0
    %418 = vmatpush2.msra.mxu0 0.0
    %419 = vmatprep.subr.mxu0 0.0
    %420 = vmatpush2.msra.mxu0 0.0
    %421 = vmatprep.subr.mxu0 0.0
    %422 = vmatpush2.msra.mxu0 0.0
    %423 = vmatprep.subr.mxu0 0.0
    %424 = vmatpush2.msra.mxu0 0.0
    %425 = vmatprep.subr.mxu0 0.0
    %426 = vmatpush2.msra.mxu0 0.0
    %427 = vmatprep.subr.mxu0 0.0
    %428 = vmatpush2.msra.mxu0 0.0
    %429 = vmatprep.subr.mxu0 0.0
    %430 = vmatpush2.msra.mxu0 0.0
    %431 = vmatprep.subr.mxu0 0.0
    %432 = vmatpush2.msra.mxu0 0.0
    %433 = vmatprep.subr.mxu0 0.0
    %434 = vmatpush2.msra.mxu0 0.0
    %435 = vmatprep.subr.mxu0 0.0
    %436 = vmatpush2.msra.mxu0 0.0
    %437 = vmatprep.subr.mxu0 0.0
    %438 = vmatpush2.msra.mxu0 0.0
    %439 = vmatprep.mubr.f32.mxu0 0.0
    %440 = vmatmul.mubr.f32.gmra.mxu0 %v274
    %v441 = vpop.f32.mrf.mxu0
    %v442 = vadd.f32 0.0, %v441
    %v443 = vpop.f32.mrf.mxu0
    %444 = vmatprep.mubr.f32.mxu0 0.0
    %445 = vmatmul.mubr.f32.gmra.mxu0 %v277
    %v446 = vpop.f32.mrf.mxu0
    %v447 = vadd.f32 0.0, %v446
    %v448 = vpop.f32.mrf.mxu0
    %449 = vmatprep.mubr.f32.mxu0 0.0
    %450 = vmatmul.mubr.f32.gmra.mxu0 %v280
    %v451 = vpop.f32.mrf.mxu0
    %v452 = vadd.f32 0.0, %v451
    %v453 = vpop.f32.mrf.mxu0
    %454 = vdwg.mxu0
    %v455 = vmul.f32 %v173, %v359
    %v456 = vmul.f32 %v175, %v361
    %v457 = vmul.f32 %v256, %v442
    %v458 = vmul.f32 %v179, %v365
    %v459 = vmul.f32 %v181, %v367
    %v460 = vmul.f32 %v261, %v447
    %v461 = vmul.f32 %v185, %v371
    %v462 = vmul.f32 %v187, %v373
    %v463 = vmul.f32 %v266, %v452
    %v464 = vadd.f32 %v455, %v458
    %vm465 = vcmask 1043456
    %v466 = vsel %vm465, %v461, 0.0
    %v467 = vadd.f32 %v464, %v466
    %v468 = vrot.slane %v467, 4
    %v469 = vadd.f32 %v467, %v468
    %v470 = vrot.slane %v469, 2
    %v471 = vadd.f32 %v469, %v470
    %v472 = vrot.slane %v471, 1
    %v473 = vadd.f32 %v471, %v472
    %v474 = vadd.f32 %v456, %v459
    %v475 = vsel %vm465, %v462, 0.0
    %v476 = vadd.f32 %v474, %v475
    %v477 = vrot.slane %v476, 4
    %v478 = vadd.f32 %v476, %v477
    %v479 = vrot.slane %v478, 2
    %v480 = vadd.f32 %v478, %v479
    %v481 = vrot.slane %v480, 1
    %v482 = vadd.f32 %v480, %v481
    %v483 = vadd.f32 %v457, %v460
    %v484 = vsel %vm465, %v463, 0.0
    %v485 = vadd.f32 %v483, %v484
    %v486 = vrot.slane %v485, 4
    %v487 = vadd.f32 %v485, %v486
    %v488 = vrot.slane %v487, 2
    %v489 = vadd.f32 %v487, %v488
    %v490 = vrot.slane %v489, 1
    %v491 = vadd.f32 %v489, %v490
    %v492 = vmul.f32 %v473, 5.0
    %v493 = vmul.f32 %v482, 5.0
    %v494 = vmul.f32 %v491, 5.0
    %v498 = vcombine.low %v492, %v493
    %v500 = vunpack.c.l.s4 1966171168
    %v501 = vunpack.c.0.s8 %v500
    %v502 = vlaneseq
    %v503 = vshrl.u32 %v502, 7
    %v504 = vsub.s32 %v501, %v503
    %v505 = vrot.slane %v498, %v504
    %v507 = vunpack.c.l.s4 1966171168
    %v508 = vunpack.c.0.s8 %v507
    %v509 = vlaneseq
    %v510 = vshrl.u32 %v509, 7
    %v511 = vsub.s32 %v508, %v510
    %v512 = vrot.slane %v494, %v511
    %v513 = vcombine.low %v505, %v512
    %v515 = vunpack.c.l.s4 1966171168
    %v516 = vunpack.c.0.s8 %v515
    %v517 = vlaneseq
    %v518 = vshrl.u32 %v517, 7
    %v519 = vsub.s32 %v516, %v518
    %v520 = vrot.slane %v513, %v519
    %v522 = vlaneseq
    %vm523 = vcmp.ge.s32.totalorder %v522, 0
    %vm524 = vcmp.lt.s32.totalorder %v522, 384
    %vm525 = vmand %vm523, %vm524
    %526 = vst.msk [vmem:[#allocation2] sm:$0x7] %vm525, %v520
    // Predicated region
    $region18: #{tpu_custom_call.1} parent=1 // pred_check
      _
    $region19: #{tpu_custom_call.1} parent=1 // pred_check_branch
      %528 = sbr.rel (0) target = $region21
    $region20: #{tpu_custom_call.1} parent=1 // pred_region
      %s530 = ssub.s32 48, 48
      %531 = vsyncadd [#allocation3], %s530
      %s533 = sshll.u32 [#allocation2], 4
      %s534 = int_to_ptr.vmem [resolvable:$true] %s533
      %536 = dma.vmem_to_hbm [thread:$0]  %s534, 48, %s4, [#allocation3]
    $region21: #{tpu_custom_call.1} parent=1 // pred_fallthru
      _
    // Predicated region
    $region22: #{tpu_custom_call.1} parent=1 // pred_check
      _
    $region23: #{tpu_custom_call.1} parent=1 // pred_check_branch
      %538 = sbr.rel (0) target = $region25
    $region24: #{tpu_custom_call.1} parent=1 // pred_region
      %539 = dma.done [#allocation3], 48
    $region25: #{tpu_custom_call.1} parent=1 // pred_fallthru
      _
    %540 = vsyncpa [#allocation3], 1

</llo_original>
